<compile_context>
chip_gen: v7x
topology: tpu7x:2x2x1
jax: 0.10.0
libtpu: 0.0.40
codegen_flags: <defaults>
</compile_context>

<pallas_src>
import functools

import jax
import jax.numpy as jnp
from jax.experimental import pallas as pl
from jax.experimental.pallas import tpu as pltpu


def _packed_mlp_kernel(x_ref, w1_ref, b1_ref, w2_ref, b2_ref, w3_ref, b3_ref, o_ref):
    # One (tp, 128) lane-packed batch tile per grid step; weights/biases are
    # VMEM-resident (constant index_map). Each dot is a dense MXU matmul.
    x = x_ref[...]                                                   # (tp, 128)

    h1 = jnp.dot(x, w1_ref[...], preferred_element_type=jnp.float32) + b1_ref[...]
    h1 = jnp.maximum(h1, 0.0)                                        # (tp, 256)

    h2 = jnp.dot(h1, w2_ref[...], preferred_element_type=jnp.float32) + b2_ref[...]
    h2 = jnp.maximum(h2, 0.0)                                        # (tp, 288)

    y = jnp.dot(h2, w3_ref[...], preferred_element_type=jnp.float32) + b3_ref[...]
    o_ref[...] = y.astype(o_ref.dtype)                               # (tp, 128), unmasked store


def pack_params(w1, b1, w2, b2, w3, b3):
    """One-time block-diagonal / lane packing of the tiny MLP weights."""
    in_features, h1 = w1.shape
    h2 = w2.shape[1]
    out_features = w3.shape[1]
    assert 128 % in_features == 0, "lane packing assumes in_features divides 128"
    pack = 128 // in_features                      # 32 samples per 128-lane row
    out_pad = max(out_features, in_features)       # 3 -> 4 so packed out width = 128

    f32 = jnp.float32
    eye = jnp.eye(pack, dtype=f32)
    w3z = jnp.pad(w3.astype(f32), ((0, 0), (0, out_pad - out_features)))
    b3z = jnp.pad(b3.reshape(1, -1).astype(f32), ((0, 0), (0, out_pad - out_features)))

    packed = dict(
        w1=jnp.kron(eye, w1.astype(f32)),                              # (128, 256)
        b1=jnp.tile(b1.reshape(1, -1).astype(f32), (1, pack)),         # (1, 256)
        w2=jnp.kron(eye, w2.astype(f32)),                              # (256, 288)
        b2=jnp.tile(b2.reshape(1, -1).astype(f32), (1, pack)),         # (1, 288)
        w3=jnp.kron(eye, w3z),                                         # (288, 128)
        b3=jnp.tile(b3z, (1, pack)),                                   # (1, 128)
    )
    meta = dict(in_features=in_features, out_features=out_features,
                out_pad=out_pad, pack=pack)
    return packed, meta


@functools.partial(
    jax.jit,
    static_argnames=("in_features", "out_features", "out_pad", "pack", "block_rows"),
)
def _mlp_forward_packed(x, w1p, b1p, w2p, b2p, w3p, b3p, *,
                        in_features, out_features, out_pad, pack, block_rows):
    batch = x.shape[0]
    x = x.astype(jnp.float32)

    # Pad batch only up to a multiple of `pack` (<= 31 rows) so the lane-packing
    # reshape below is a free contiguous bitcast. No full-tile pad/slice passes.
    padded = pl.cdiv(batch, pack) * pack
    if padded != batch:
        x = jnp.pad(x, ((0, padded - batch), (0, 0)))
    rows = padded // pack
    xp = x.reshape(rows, pack * in_features)        # (rows, 128) — free reshape

    w_out = pack * out_pad                          # 128 (lane-dense output slab)

    # Row tile: large enough to amortize per-grid-step overhead (~0.35 us) and
    # make each DMA big; small enough for VMEM on every generation (footprint
    # ~ tp * 3.5 KiB + ~0.6 MiB of packed weights, well under v7x's 32 MiB
    # scoped default). Keep >= 2 grid steps when possible so v7x's second
    # TensorCore gets work via the "parallel" batch axis.
    if rows <= 16:
        tp = rows
    else:
        tp = min(block_rows, ((rows + 1) // 2 + 7) // 8 * 8)
    grid_rows = pl.cdiv(rows, tp)

    const2d = lambda i: (0, 0)  # weights/biases stay VMEM-resident across the grid

    out_packed = pl.pallas_call(
        _packed_mlp_kernel,
        out_shape=jax.ShapeDtypeStruct((rows, w_out), jnp.float32),
        grid=(grid_rows,),
        in_specs=[
            pl.BlockSpec((tp, pack * in_features), lambda i: (i, 0)),
            pl.BlockSpec(w1p.shape, const2d), pl.BlockSpec(b1p.shape, const2d),
            pl.BlockSpec(w2p.shape, const2d), pl.BlockSpec(b2p.shape, const2d),
            pl.BlockSpec(w3p.shape, const2d), pl.BlockSpec(b3p.shape, const2d),
        ],
        out_specs=pl.BlockSpec((tp, w_out), lambda i: (i, 0)),
        compiler_params=pltpu.CompilerParams(
            dimension_semantics=("parallel",),   # megacore sharding on v7x
        ),
    )(xp, w1p, b1p, w2p, b2p, w3p, b3p)

    # Free contiguous reshape back to per-sample rows; drop pad lanes / pad rows.
    out = out_packed.reshape(padded, out_pad)[:batch, :out_features]
    return out


def mlp_forward(x, packed, meta, *, block_rows=256):
    return _mlp_forward_packed(
        x, packed["w1"], packed["b1"], packed["w2"], packed["b2"],
        packed["w3"], packed["b3"],
        in_features=meta["in_features"], out_features=meta["out_features"],
        out_pad=meta["out_pad"], pack=meta["pack"], block_rows=block_rows)


def init_params(key, in_features=4, h1=8, h2=9, out_features=3):
    # Deterministic init mimicking nn.Linear's uniform(-1/sqrt(fan_in), +1/sqrt(fan_in)).
    # Weights stored (in, out) so forward is x @ W + b (== PyTorch's x @ W.T).
    def linear_init(k, fan_in, fan_out):
        kw, kb = jax.random.split(k)
        bound = 1.0 / jnp.sqrt(fan_in)
        w = jax.random.uniform(kw, (fan_in, fan_out), jnp.float32, -bound, bound)
        b = jax.random.uniform(kb, (1, fan_out), jnp.float32, -bound, bound)
        return w, b

    k1, k2, k3 = jax.random.split(key, 3)
    w1, b1 = linear_init(k1, in_features, h1)
    w2, b2 = linear_init(k2, h1, h2)
    w3, b3 = linear_init(k3, h2, out_features)
    return w1, b1, w2, b2, w3, b3


def _ref_mlp(x, w1, b1, w2, b2, w3, b3):
    h = jnp.maximum(x @ w1 + b1, 0.0)
    h = jnp.maximum(h @ w2 + b2, 0.0)
    return h @ w3 + b3


if __name__ == "__main__":
    key = jax.random.PRNGKey(0)
    kx1, kx2, kx3, kp = jax.random.split(key, 4)

    in_features, out_features = 4, 3
    w1, b1, w2, b2, w3, b3 = init_params(kp)
    packed, meta = pack_params(w1, b1, w2, b2, w3, b3)

    # Case 1: batch a multiple of the 32-sample lane pack (single packed tile).
    batch1 = 64
    x1 = jax.random.normal(kx1, (batch1, in_features), jnp.float32)
    out1 = mlp_forward(x1, packed, meta)
    jax.block_until_ready(out1)
    assert out1.shape == (batch1, out_features)
    assert jnp.allclose(out1, _ref_mlp(x1, w1, b1, w2, b2, w3, b3), atol=1e-5, rtol=1e-5)

    # Case 2: ragged batch (exercises the small pad-to-32 path).
    batch2 = 45
    x2 = jax.random.normal(kx2, (batch2, in_features), jnp.float32)
    out2 = mlp_forward(x2, packed, meta)
    jax.block_until_ready(out2)
    assert out2.shape == (batch2, out_features)
    assert jnp.allclose(out2, _ref_mlp(x2, w1, b1, w2, b2, w3, b3), atol=1e-5, rtol=1e-5)

    # Case 3: multi-tile grid with a partial last block (edge-masked rows).
    batch3 = 1234
    x3 = jax.random.normal(kx3, (batch3, in_features), jnp.float32)
    out3 = mlp_forward(x3, packed, meta)
    jax.block_until_ready(out3)
    assert out3.shape == (batch3, out_features)
    assert jnp.allclose(out3, _ref_mlp(x3, w1, b1, w2, b2, w3, b3), atol=1e-5, rtol=1e-5)

    print("KERNEL_OK")
</pallas_src>

<mosaic_0001>
module attributes {stable_mosaic.version = 11 : i64} {
  func.func @_packed_mlp_kernel(%arg0: i32, %arg1: memref<2x128xf32, #tpu.memory_space<vmem>>, %arg2: memref<128x256xf32, #tpu.memory_space<vmem>>, %arg3: memref<1x256xf32, #tpu.memory_space<vmem>>, %arg4: memref<256x288xf32, #tpu.memory_space<vmem>>, %arg5: memref<1x288xf32, #tpu.memory_space<vmem>>, %arg6: memref<288x128xf32, #tpu.memory_space<vmem>>, %arg7: memref<1x128xf32, #tpu.memory_space<vmem>>, %arg8: memref<2x128xf32, #tpu.memory_space<vmem>>) attributes {dimension_semantics = [#tpu.dimension_semantics<parallel>], iteration_bounds = array<i64: 1>, scalar_prefetch = 0 : i64, scratch_operands = 0 : i64, tpu.core_type = #tpu.core_type<tc>, window_params = [{transform_indices = @transform_0, window_bounds = array<i64: 2, 128>}, {pipeline_mode = #tpu.pipeline_mode<synchronous>, transform_indices = @transform_1, window_bounds = array<i64: 128, 256>}, {pipeline_mode = #tpu.pipeline_mode<synchronous>, transform_indices = @transform_2, window_bounds = array<i64: 1, 256>}, {pipeline_mode = #tpu.pipeline_mode<synchronous>, transform_indices = @transform_3, window_bounds = array<i64: 256, 288>}, {pipeline_mode = #tpu.pipeline_mode<synchronous>, transform_indices = @transform_4, window_bounds = array<i64: 1, 288>}, {pipeline_mode = #tpu.pipeline_mode<synchronous>, transform_indices = @transform_5, window_bounds = array<i64: 288, 128>}, {pipeline_mode = #tpu.pipeline_mode<synchronous>, transform_indices = @transform_6, window_bounds = array<i64: 1, 128>}, {transform_indices = @transform_7, window_bounds = array<i64: 2, 128>}]} {
    %c0 = arith.constant 0 : index
    %c0_0 = arith.constant 0 : index
    %0 = vector.load %arg1[%c0, %c0_0] : memref<2x128xf32, #tpu.memory_space<vmem>>, vector<2x128xf32>
    %c0_1 = arith.constant 0 : index
    %c0_2 = arith.constant 0 : index
    %1 = vector.load %arg2[%c0_1, %c0_2] : memref<128x256xf32, #tpu.memory_space<vmem>>, vector<128x256xf32>
    %cst = arith.constant dense<0.000000e+00> : vector<2x256xf32>
    %2 = tpu.matmul %0, %1, %cst {dimension_numbers = #tpu.dot_dimension_numbers<[1], [0], [0], [1], [0, 0, 1, 1], [], []>} : vector<2x128xf32>, vector<128x256xf32>, vector<2x256xf32> -> vector<2x256xf32>
    %c0_3 = arith.constant 0 : index
    %c0_4 = arith.constant 0 : index
    %3 = vector.load %arg3[%c0_3, %c0_4] : memref<1x256xf32, #tpu.memory_space<vmem>>, vector<1x256xf32>
    %4 = vector.broadcast %3 : vector<1x256xf32> to vector<2x256xf32>
    %5 = arith.addf %2, %4 : vector<2x256xf32>
    %cst_5 = arith.constant 0.000000e+00 : f32
    %6 = vector.broadcast %cst_5 : f32 to vector<2x256xf32>
    %7 = arith.maximumf %5, %6 : vector<2x256xf32>
    %c0_6 = arith.constant 0 : index
    %c0_7 = arith.constant 0 : index
    %8 = vector.load %arg4[%c0_6, %c0_7] : memref<256x288xf32, #tpu.memory_space<vmem>>, vector<256x288xf32>
    %cst_8 = arith.constant dense<0.000000e+00> : vector<2x288xf32>
    %9 = tpu.matmul %7, %8, %cst_8 {dimension_numbers = #tpu.dot_dimension_numbers<[1], [0], [0], [1], [0, 0, 1, 1], [], []>} : vector<2x256xf32>, vector<256x288xf32>, vector<2x288xf32> -> vector<2x288xf32>
    %c0_9 = arith.constant 0 : index
    %c0_10 = arith.constant 0 : index
    %10 = vector.load %arg5[%c0_9, %c0_10] : memref<1x288xf32, #tpu.memory_space<vmem>>, vector<1x288xf32>
    %11 = vector.broadcast %10 : vector<1x288xf32> to vector<2x288xf32>
    %12 = arith.addf %9, %11 : vector<2x288xf32>
    %cst_11 = arith.constant 0.000000e+00 : f32
    %13 = vector.broadcast %cst_11 : f32 to vector<2x288xf32>
    %14 = arith.maximumf %12, %13 : vector<2x288xf32>
    %c0_12 = arith.constant 0 : index
    %c0_13 = arith.constant 0 : index
    %15 = vector.load %arg6[%c0_12, %c0_13] : memref<288x128xf32, #tpu.memory_space<vmem>>, vector<288x128xf32>
    %cst_14 = arith.constant dense<0.000000e+00> : vector<2x128xf32>
    %16 = tpu.matmul %14, %15, %cst_14 {dimension_numbers = #tpu.dot_dimension_numbers<[1], [0], [0], [1], [0, 0, 1, 1], [], []>} : vector<2x288xf32>, vector<288x128xf32>, vector<2x128xf32> -> vector<2x128xf32>
    %c0_15 = arith.constant 0 : index
    %c0_16 = arith.constant 0 : index
    %17 = vector.load %arg7[%c0_15, %c0_16] : memref<1x128xf32, #tpu.memory_space<vmem>>, vector<1x128xf32>
    %18 = vector.broadcast %17 : vector<1x128xf32> to vector<2x128xf32>
    %19 = arith.addf %16, %18 : vector<2x128xf32>
    %c0_17 = arith.constant 0 : index
    %c0_18 = arith.constant 0 : index
    %20 = vector.load %arg8[%c0_17, %c0_18] : memref<2x128xf32, #tpu.memory_space<vmem>>, vector<2x128xf32>
    tpu.vector_store %arg8[%c0_17, %c0_18], %19 {strides = array<i32>} : memref<2x128xf32, #tpu.memory_space<vmem>>, vector<2x128xf32>,
    return
  }
  func.func @transform_0(%arg0: i32) -> (i32, i32) {
    %c0_i32 = arith.constant 0 : i32
    %c0_i32_0 = arith.constant 0 : i32
    return %arg0, %c0_i32 : i32, i32
  }
  func.func @transform_1(%arg0: i32) -> (i32, i32) {
    %c0_i32 = arith.constant 0 : i32
    %c0_i32_0 = arith.constant 0 : i32
    %c0_i32_1 = arith.constant 0 : i32
    return %c0_i32, %c0_i32_0 : i32, i32
  }
  func.func @transform_2(%arg0: i32) -> (i32, i32) {
    %c0_i32 = arith.constant 0 : i32
    %c0_i32_0 = arith.constant 0 : i32
    %c0_i32_1 = arith.constant 0 : i32
    return %c0_i32, %c0_i32_0 : i32, i32
  }
  func.func @transform_3(%arg0: i32) -> (i32, i32) {
    %c0_i32 = arith.constant 0 : i32
    %c0_i32_0 = arith.constant 0 : i32
    %c0_i32_1 = arith.constant 0 : i32
    return %c0_i32, %c0_i32_0 : i32, i32
  }
  func.func @transform_4(%arg0: i32) -> (i32, i32) {
    %c0_i32 = arith.constant 0 : i32
    %c0_i32_0 = arith.constant 0 : i32
    %c0_i32_1 = arith.constant 0 : i32
    return %c0_i32, %c0_i32_0 : i32, i32
  }
  func.func @transform_5(%arg0: i32) -> (i32, i32) {
    %c0_i32 = arith.constant 0 : i32
    %c0_i32_0 = arith.constant 0 : i32
    %c0_i32_1 = arith.constant 0 : i32
    return %c0_i32, %c0_i32_0 : i32, i32
  }
  func.func @transform_6(%arg0: i32) -> (i32, i32) {
    %c0_i32 = arith.constant 0 : i32
    %c0_i32_0 = arith.constant 0 : i32
    %c0_i32_1 = arith.constant 0 : i32
    return %c0_i32, %c0_i32_0 : i32, i32
  }
  func.func @transform_7(%arg0: i32) -> (i32, i32) {
    %c0_i32 = arith.constant 0 : i32
    %c0_i32_0 = arith.constant 0 : i32
    return %arg0, %c0_i32 : i32, i32
  }
}

</mosaic_0001>

<llo_original>
// kernel: _mlp_forward_packed.1
$region0: #{_mlp_forward_packed.1}
  #allocation0 [shape = 'u32[]', space=smem, size = 0x4, offset = 0x4, fixed_abs, tag = 'smem constant byte address 0x4 - core index']
  #allocation1 [shape = 'u32[144,128]{1,0:T(1,128)}', space=vmem, size = 0x12000, scoped, tag = 'internal scratch']
  %s0 = inlined_call_operand.vmem [shape: f32[2,128], index: 0, kind: input, shape index: {}]
  %s1 = inlined_call_operand.vmem [shape: f32[128,256], index: 1, kind: input, shape index: {}]
  %s2 = inlined_call_operand.vmem [shape: f32[1,256], index: 2, kind: input, shape index: {}]
  %s3 = inlined_call_operand.vmem [shape: f32[256,288], index: 3, kind: input, shape index: {}]
  %s4 = inlined_call_operand.vmem [shape: f32[1,288], index: 4, kind: input, shape index: {}]
  %s5 = inlined_call_operand.vmem [shape: f32[288,128], index: 5, kind: input, shape index: {}]
  %s6 = inlined_call_operand.vmem [shape: f32[1,128], index: 6, kind: input, shape index: {}]
  %s7 = inlined_call_operand.vmem [shape: f32[2,128], index: 7, kind: output, shape index: {}]
  %s8 = sld [smem:[#allocation0]]
  $region38: #{_mlp_forward_packed.1} parent=0
    _
  %s10 = ssub.s32 1, %s8
  %s11 = scalar_select 0, %s10, %s8
  // Predicated region
  $region2: #{_mlp_forward_packed.1} parent=0 // pred_check
    _
  $region3: #{_mlp_forward_packed.1} parent=0 // pred_check_branch
    %13 = sbr.rel (0) target = $region5
  $region4: #{_mlp_forward_packed.1} parent=0 // pred_region
    _
  $region5: #{_mlp_forward_packed.1} parent=0 // pred_fallthru
    _
  // Predicated region
  $region6: #{_mlp_forward_packed.1} parent=0 // pred_check
    _
  $region7: #{_mlp_forward_packed.1} parent=0 // pred_check_branch
    %15 = sbr.rel (0) target = $region9
  $region8: #{_mlp_forward_packed.1} parent=0 // pred_region
    _
  $region9: #{_mlp_forward_packed.1} parent=0 // pred_fallthru
    _
  // Predicated region
  $region10: #{_mlp_forward_packed.1} parent=0 // pred_check
    _
  $region11: #{_mlp_forward_packed.1} parent=0 // pred_check_branch
    %17 = sbr.rel (0) target = $region13
  $region12: #{_mlp_forward_packed.1} parent=0 // pred_region
    _
  $region13: #{_mlp_forward_packed.1} parent=0 // pred_fallthru
    _
  // Predicated region
  $region14: #{_mlp_forward_packed.1} parent=0 // pred_check
    _
  $region15: #{_mlp_forward_packed.1} parent=0 // pred_check_branch
    %19 = sbr.rel (0) target = $region17
  $region16: #{_mlp_forward_packed.1} parent=0 // pred_region
    _
  $region17: #{_mlp_forward_packed.1} parent=0 // pred_fallthru
    _
  // Predicated region
  $region18: #{_mlp_forward_packed.1} parent=0 // pred_check
    _
  $region19: #{_mlp_forward_packed.1} parent=0 // pred_check_branch
    %21 = sbr.rel (0) target = $region21
  $region20: #{_mlp_forward_packed.1} parent=0 // pred_region
    _
  $region21: #{_mlp_forward_packed.1} parent=0 // pred_fallthru
    _
  // Predicated region
  $region22: #{_mlp_forward_packed.1} parent=0 // pred_check
    _
  $region23: #{_mlp_forward_packed.1} parent=0 // pred_check_branch
    %23 = sbr.rel (0) target = $region25
  $region24: #{_mlp_forward_packed.1} parent=0 // pred_region
    _
  $region25: #{_mlp_forward_packed.1} parent=0 // pred_fallthru
    _
  // Predicated region
  $region26: #{_mlp_forward_packed.1} parent=0 // pred_check
    _
  $region27: #{_mlp_forward_packed.1} parent=0 // pred_check_branch
    %25 = sbr.rel (0) target = $region29
  $region28: #{_mlp_forward_packed.1} parent=0 // pred_region
    _
  $region29: #{_mlp_forward_packed.1} parent=0 // pred_fallthru
    _
  %v26 = vld [vmem:[%s0] sm:$0x3]
  %v27 = vld [vmem:[%s1] sm:$0xff]
  %v28 = vld [vmem:[%s1 + $0x8] sm:$0xff]
  %v29 = vld [vmem:[%s1 + $0x10] sm:$0xff]
  %v30 = vld [vmem:[%s1 + $0x18] sm:$0xff]
  %v31 = vld [vmem:[%s1 + $0x20] sm:$0xff]
  %v32 = vld [vmem:[%s1 + $0x28] sm:$0xff]
  %v33 = vld [vmem:[%s1 + $0x30] sm:$0xff]
  %v34 = vld [vmem:[%s1 + $0x38] sm:$0xff]
  %v35 = vld [vmem:[%s1 + $0x40] sm:$0xff]
  %v36 = vld [vmem:[%s1 + $0x48] sm:$0xff]
  %v37 = vld [vmem:[%s1 + $0x50] sm:$0xff]
  %v38 = vld [vmem:[%s1 + $0x58] sm:$0xff]
  %v39 = vld [vmem:[%s1 + $0x60] sm:$0xff]
  %v40 = vld [vmem:[%s1 + $0x68] sm:$0xff]
  %v41 = vld [vmem:[%s1 + $0x70] sm:$0xff]
  %v42 = vld [vmem:[%s1 + $0x78] sm:$0xff]
  %v43 = vld [vmem:[%s1 + $0x80] sm:$0xff]
  %v44 = vld [vmem:[%s1 + $0x88] sm:$0xff]
  %v45 = vld [vmem:[%s1 + $0x90] sm:$0xff]
  %v46 = vld [vmem:[%s1 + $0x98] sm:$0xff]
  %v47 = vld [vmem:[%s1 + $0xa0] sm:$0xff]
  %v48 = vld [vmem:[%s1 + $0xa8] sm:$0xff]
  %v49 = vld [vmem:[%s1 + $0xb0] sm:$0xff]
  %v50 = vld [vmem:[%s1 + $0xb8] sm:$0xff]
  %v51 = vld [vmem:[%s1 + $0xc0] sm:$0xff]
  %v52 = vld [vmem:[%s1 + $0xc8] sm:$0xff]
  %v53 = vld [vmem:[%s1 + $0xd0] sm:$0xff]
  %v54 = vld [vmem:[%s1 + $0xd8] sm:$0xff]
  %v55 = vld [vmem:[%s1 + $0xe0] sm:$0xff]
  %v56 = vld [vmem:[%s1 + $0xe8] sm:$0xff]
  %v57 = vld [vmem:[%s1 + $0xf0] sm:$0xff]
  %v58 = vld [vmem:[%s1 + $0xf8] sm:$0xff]
  %v59 = vld [vmem:[%s2] sm:$0x3]
  %v61 = vlaneseq
  %v62 = vshrl.u32 %v61, 7
  %v63 = vsub.s32 0, %v62
  %v64 = vrot.slane %v59, %v63
  %v65 = vlaneseq
  %v66 = vshrl.u32 %v65, 7
  %v67 = vsub.s32 1, %v66
  %v68 = vrot.slane %v59, %v67
  %71 = vmatprep.subr.mxu0 %v28
  %72 = vmatpush1.msra.mxu0 %v27
  %73 = vmatprep.subr.mxu0 %v30
  %74 = vmatpush1.msra.mxu0 %v29
  %75 = vmatprep.subr.mxu0 %v32
  %76 = vmatpush1.msra.mxu0 %v31
  %77 = vmatprep.subr.mxu0 %v34
  %78 = vmatpush1.msra.mxu0 %v33
  %79 = vmatprep.subr.mxu0 %v36
  %80 = vmatpush1.msra.mxu0 %v35
  %81 = vmatprep.subr.mxu0 %v38
  %82 = vmatpush1.msra.mxu0 %v37
  %83 = vmatprep.subr.mxu0 %v40
  %84 = vmatpush1.msra.mxu0 %v39
  %85 = vmatprep.subr.mxu0 %v42
  %86 = vmatpush1.msra.mxu0 %v41
  %87 = vmatprep.subr.mxu0 %v44
  %88 = vmatpush1.msra.mxu0 %v43
  %89 = vmatprep.subr.mxu0 %v46
  %90 = vmatpush1.msra.mxu0 %v45
  %91 = vmatprep.subr.mxu0 %v48
  %92 = vmatpush1.msra.mxu0 %v47
  %93 = vmatprep.subr.mxu0 %v50
  %94 = vmatpush1.msra.mxu0 %v49
  %95 = vmatprep.subr.mxu0 %v52
  %96 = vmatpush1.msra.mxu0 %v51
  %97 = vmatprep.subr.mxu0 %v54
  %98 = vmatpush1.msra.mxu0 %v53
  %99 = vmatprep.subr.mxu0 %v56
  %100 = vmatpush1.msra.mxu0 %v55
  %101 = vmatprep.subr.mxu0 %v58
  %102 = vmatpush1.msra.mxu0 %v57
  %103 = vmatprep.subr.mxu0 0.0
  %104 = vmatpush1.msra.mxu0 0.0
  %105 = vmatprep.subr.mxu0 0.0
  %106 = vmatpush1.msra.mxu0 0.0
  %107 = vmatprep.subr.mxu0 0.0
  %108 = vmatpush1.msra.mxu0 0.0
  %109 = vmatprep.subr.mxu0 0.0
  %110 = vmatpush1.msra.mxu0 0.0
  %111 = vmatprep.subr.mxu0 0.0
  %112 = vmatpush1.msra.mxu0 0.0
  %113 = vmatprep.subr.mxu0 0.0
  %114 = vmatpush1.msra.mxu0 0.0
  %115 = vmatprep.subr.mxu0 0.0
  %116 = vmatpush1.msra.mxu0 0.0
  %117 = vmatprep.subr.mxu0 0.0
  %118 = vmatpush1.msra.mxu0 0.0
  %119 = vmatprep.subr.mxu0 0.0
  %120 = vmatpush1.msra.mxu0 0.0
  %121 = vmatprep.subr.mxu0 0.0
  %122 = vmatpush1.msra.mxu0 0.0
  %123 = vmatprep.subr.mxu0 0.0
  %124 = vmatpush1.msra.mxu0 0.0
  %125 = vmatprep.subr.mxu0 0.0
  %126 = vmatpush1.msra.mxu0 0.0
  %127 = vmatprep.subr.mxu0 0.0
  %128 = vmatpush1.msra.mxu0 0.0
  %129 = vmatprep.subr.mxu0 0.0
  %130 = vmatpush1.msra.mxu0 0.0
  %131 = vmatprep.subr.mxu0 0.0
  %132 = vmatpush1.msra.mxu0 0.0
  %133 = vmatprep.subr.mxu0 0.0
  %134 = vmatpush1.msra.mxu0 0.0
  %135 = vmatprep.mubr.f32.mxu0 0.0
  %136 = vmatmul.mubr.f32.gmra.mrb[0].mxu0 %v26
  %v137 = vpop.f32.mrb[0].mxu0
  %v138 = vadd.f32 %v64, %v137
  %v139 = vpop.f32.mrb[0].mxu0
  %v140 = vadd.f32 %v68, %v139
  %141 = vdwg.mxu0
  %v142 = vmax.f32 %v138, 0.0
  %v143 = vmax.f32 %v140, 0.0
  %v144 = vld [vmem:[%s3] sm:$0xff]
  %v145 = vld [vmem:[%s3 + $0x8] sm:$0xff]
  %v146 = vld [vmem:[%s3 + $0x10] sm:$0xff]
  %v147 = vld [vmem:[%s3 + $0x18] sm:$0xff]
  %v148 = vld [vmem:[%s3 + $0x20] sm:$0xff]
  %v149 = vld [vmem:[%s3 + $0x28] sm:$0xff]
  %v150 = vld [vmem:[%s3 + $0x30] sm:$0xff]
  %v151 = vld [vmem:[%s3 + $0x38] sm:$0xff]
  %v152 = vld [vmem:[%s3 + $0x40] sm:$0xff]
  %v153 = vld [vmem:[%s3 + $0x48] sm:$0xff]
  %v154 = vld [vmem:[%s3 + $0x50] sm:$0xff]
  %v155 = vld [vmem:[%s3 + $0x58] sm:$0xff]
  %v156 = vld [vmem:[%s3 + $0x60] sm:$0xff]
  %v157 = vld [vmem:[%s3 + $0x68] sm:$0xff]
  %v158 = vld [vmem:[%s3 + $0x70] sm:$0xff]
  %v159 = vld [vmem:[%s3 + $0x78] sm:$0xff]
  %v160 = vld [vmem:[%s3 + $0x80] sm:$0xff]
  %v161 = vld [vmem:[%s3 + $0x88] sm:$0xff]
  %v162 = vld [vmem:[%s3 + $0x90] sm:$0xff]
  %v163 = vld [vmem:[%s3 + $0x98] sm:$0xff]
  %v164 = vld [vmem:[%s3 + $0xa0] sm:$0xff]
  %v165 = vld [vmem:[%s3 + $0xa8] sm:$0xff]
  %v166 = vld [vmem:[%s3 + $0xb0] sm:$0xff]
  %v167 = vld [vmem:[%s3 + $0xb8] sm:$0xff]
  %v168 = vld [vmem:[%s3 + $0xc0] sm:$0xff]
  %v169 = vld [vmem:[%s3 + $0xc8] sm:$0xff]
  %v170 = vld [vmem:[%s3 + $0xd0] sm:$0xff]
  %v171 = vld [vmem:[%s3 + $0xd8] sm:$0xff]
  %v172 = vld [vmem:[%s3 + $0xe0] sm:$0xff]
  %v173 = vld [vmem:[%s3 + $0xe8] sm:$0xff]
  %v174 = vld [vmem:[%s3 + $0xf0] sm:$0xff]
  %v175 = vld [vmem:[%s3 + $0xf8] sm:$0xff]
  %v176 = vld [vmem:[%s3 + $0x100] sm:$0xff]
  %v177 = vld [vmem:[%s3 + $0x108] sm:$0xff]
  %v178 = vld [vmem:[%s3 + $0x110] sm:$0xff]
  %v179 = vld [vmem:[%s3 + $0x118] sm:$0xff]
  %v180 = vld [vmem:[%s3 + $0x120] sm:$0xff]
  %v181 = vld [vmem:[%s3 + $0x128] sm:$0xff]
  %v182 = vld [vmem:[%s3 + $0x130] sm:$0xff]
  %v183 = vld [vmem:[%s3 + $0x138] sm:$0xff]
  %v184 = vld [vmem:[%s3 + $0x140] sm:$0xff]
  %v185 = vld [vmem:[%s3 + $0x148] sm:$0xff]
  %v186 = vld [vmem:[%s3 + $0x150] sm:$0xff]
  %v187 = vld [vmem:[%s3 + $0x158] sm:$0xff]
  %v188 = vld [vmem:[%s3 + $0x160] sm:$0xff]
  %v189 = vld [vmem:[%s3 + $0x168] sm:$0xff]
  %v190 = vld [vmem:[%s3 + $0x170] sm:$0xff]
  %v191 = vld [vmem:[%s3 + $0x178] sm:$0xff]
  %v192 = vld [vmem:[%s3 + $0x180] sm:$0xff]
  %v193 = vld [vmem:[%s3 + $0x188] sm:$0xff]
  %v194 = vld [vmem:[%s3 + $0x190] sm:$0xff]
  %v195 = vld [vmem:[%s3 + $0x198] sm:$0xff]
  %v196 = vld [vmem:[%s3 + $0x1a0] sm:$0xff]
  %v197 = vld [vmem:[%s3 + $0x1a8] sm:$0xff]
  %v198 = vld [vmem:[%s3 + $0x1b0] sm:$0xff]
  %v199 = vld [vmem:[%s3 + $0x1b8] sm:$0xff]
  %v200 = vld [vmem:[%s3 + $0x1c0] sm:$0xff]
  %v201 = vld [vmem:[%s3 + $0x1c8] sm:$0xff]
  %v202 = vld [vmem:[%s3 + $0x1d0] sm:$0xff]
  %v203 = vld [vmem:[%s3 + $0x1d8] sm:$0xff]
  %v204 = vld [vmem:[%s3 + $0x1e0] sm:$0xff]
  %v205 = vld [vmem:[%s3 + $0x1e8] sm:$0xff]
  %v206 = vld [vmem:[%s3 + $0x1f0] sm:$0xff]
  %v207 = vld [vmem:[%s3 + $0x1f8] sm:$0xff]
  %v208 = vld [vmem:[%s3 + $0x200] sm:$0xff]
  %v209 = vld [vmem:[%s3 + $0x208] sm:$0xff]
  %v210 = vld [vmem:[%s3 + $0x210] sm:$0xff]
  %v211 = vld [vmem:[%s3 + $0x218] sm:$0xff]
  %v212 = vld [vmem:[%s3 + $0x220] sm:$0xff]
  %v213 = vld [vmem:[%s3 + $0x228] sm:$0xff]
  %v214 = vld [vmem:[%s3 + $0x230] sm:$0xff]
  %v215 = vld [vmem:[%s3 + $0x238] sm:$0xff]
  %v216 = vld [vmem:[%s3 + $0x240] sm:$0xff]
  %v217 = vld [vmem:[%s3 + $0x248] sm:$0xff]
  %v218 = vld [vmem:[%s3 + $0x250] sm:$0xff]
  %v219 = vld [vmem:[%s3 + $0x258] sm:$0xff]
  %v220 = vld [vmem:[%s3 + $0x260] sm:$0xff]
  %v221 = vld [vmem:[%s3 + $0x268] sm:$0xff]
  %v222 = vld [vmem:[%s3 + $0x270] sm:$0xff]
  %v223 = vld [vmem:[%s3 + $0x278] sm:$0xff]
  %v224 = vld [vmem:[%s3 + $0x280] sm:$0xff]
  %v225 = vld [vmem:[%s3 + $0x288] sm:$0xff]
  %v226 = vld [vmem:[%s3 + $0x290] sm:$0xff]
  %v227 = vld [vmem:[%s3 + $0x298] sm:$0xff]
  %v228 = vld [vmem:[%s3 + $0x2a0] sm:$0xff]
  %v229 = vld [vmem:[%s3 + $0x2a8] sm:$0xff]
  %v230 = vld [vmem:[%s3 + $0x2b0] sm:$0xff]
  %v231 = vld [vmem:[%s3 + $0x2b8] sm:$0xff]
  %v232 = vld [vmem:[%s3 + $0x2c0] sm:$0xff]
  %v233 = vld [vmem:[%s3 + $0x2c8] sm:$0xff]
  %v234 = vld [vmem:[%s3 + $0x2d0] sm:$0xff]
  %v235 = vld [vmem:[%s3 + $0x2d8] sm:$0xff]
  %v236 = vld [vmem:[%s3 + $0x2e0] sm:$0xff]
  %v237 = vld [vmem:[%s3 + $0x2e8] sm:$0xff]
  %v238 = vld [vmem:[%s3 + $0x2f0] sm:$0xff]
  %v239 = vld [vmem:[%s3 + $0x2f8] sm:$0xff]
  %v240 = vld [vmem:[%s4] sm:$0x7]
  %v242 = vlaneseq
  %v243 = vshrl.u32 %v242, 7
  %v244 = vsub.s32 0, %v243
  %v245 = vrot.slane %v240, %v244
  %v246 = vlaneseq
  %v247 = vshrl.u32 %v246, 7
  %v248 = vsub.s32 1, %v247
  %v249 = vrot.slane %v240, %v248
  %v250 = vlaneseq
  %v251 = vshrl.u32 %v250, 7
  %v252 = vsub.s32 2, %v251
  %v253 = vrot.slane %v240, %v252
  %257 = vmatprep.subr.mxu0 %v145
  %258 = vmatpush1.msra.mxu0 %v144
  %259 = vmatprep.subr.mxu0 %v148
  %260 = vmatpush1.msra.mxu0 %v147
  %261 = vmatprep.subr.mxu0 %v151
  %262 = vmatpush1.msra.mxu0 %v150
  %263 = vmatprep.subr.mxu0 %v154
  %264 = vmatpush1.msra.mxu0 %v153
  %265 = vmatprep.subr.mxu0 %v157
  %266 = vmatpush1.msra.mxu0 %v156
  %267 = vmatprep.subr.mxu0 %v160
  %268 = vmatpush1.msra.mxu0 %v159
  %269 = vmatprep.subr.mxu0 %v163
  %270 = vmatpush1.msra.mxu0 %v162
  %271 = vmatprep.subr.mxu0 %v166
  %272 = vmatpush1.msra.mxu0 %v165
  %273 = vmatprep.subr.mxu0 %v169
  %274 = vmatpush1.msra.mxu0 %v168
  %275 = vmatprep.subr.mxu0 %v172
  %276 = vmatpush1.msra.mxu0 %v171
  %277 = vmatprep.subr.mxu0 %v175
  %278 = vmatpush1.msra.mxu0 %v174
  %279 = vmatprep.subr.mxu0 %v178
  %280 = vmatpush1.msra.mxu0 %v177
  %281 = vmatprep.subr.mxu0 %v181
  %282 = vmatpush1.msra.mxu0 %v180
  %283 = vmatprep.subr.mxu0 %v184
  %284 = vmatpush1.msra.mxu0 %v183
  %285 = vmatprep.subr.mxu0 %v187
  %286 = vmatpush1.msra.mxu0 %v186
  %287 = vmatprep.subr.mxu0 %v190
  %288 = vmatpush1.msra.mxu0 %v189
  %289 = vmatprep.subr.mxu0 %v193
  %290 = vmatpush1.msra.mxu0 %v192
  %291 = vmatprep.subr.mxu0 %v196
  %292 = vmatpush1.msra.mxu0 %v195
  %293 = vmatprep.subr.mxu0 %v199
  %294 = vmatpush1.msra.mxu0 %v198
  %295 = vmatprep.subr.mxu0 %v202
  %296 = vmatpush1.msra.mxu0 %v201
  %297 = vmatprep.subr.mxu0 %v205
  %298 = vmatpush1.msra.mxu0 %v204
  %299 = vmatprep.subr.mxu0 %v208
  %300 = vmatpush1.msra.mxu0 %v207
  %301 = vmatprep.subr.mxu0 %v211
  %302 = vmatpush1.msra.mxu0 %v210
  %303 = vmatprep.subr.mxu0 %v214
  %304 = vmatpush1.msra.mxu0 %v213
  %305 = vmatprep.subr.mxu0 %v217
  %306 = vmatpush1.msra.mxu0 %v216
  %307 = vmatprep.subr.mxu0 %v220
  %308 = vmatpush1.msra.mxu0 %v219
  %309 = vmatprep.subr.mxu0 %v223
  %310 = vmatpush1.msra.mxu0 %v222
  %311 = vmatprep.subr.mxu0 %v226
  %312 = vmatpush1.msra.mxu0 %v225
  %313 = vmatprep.subr.mxu0 %v229
  %314 = vmatpush1.msra.mxu0 %v228
  %315 = vmatprep.subr.mxu0 %v232
  %316 = vmatpush1.msra.mxu0 %v231
  %317 = vmatprep.subr.mxu0 %v235
  %318 = vmatpush1.msra.mxu0 %v234
  %319 = vmatprep.subr.mxu0 %v238
  %320 = vmatpush1.msra.mxu0 %v237
  %321 = vmatprep.mubr.f32.mxu0 %v143
  %322 = vmatmul.mubr.f32.gmra.mrb[0].mxu0 %v142
  %v323 = vpop.f32.mrb[0].mxu0
  %v324 = vadd.f32 %v245, %v323
  %v325 = vpop.f32.mrb[0].mxu0
  %v326 = vadd.f32 %v249, %v325
  %327 = vdwg.mxu0
  %328 = vmatprep.subr.mxu0 0.0
  %329 = vmatpush1.msra.mxu0 %v146
  %330 = vmatprep.subr.mxu0 0.0
  %331 = vmatpush1.msra.mxu0 %v149
  %332 = vmatprep.subr.mxu0 0.0
  %333 = vmatpush1.msra.mxu0 %v152
  %334 = vmatprep.subr.mxu0 0.0
  %335 = vmatpush1.msra.mxu0 %v155
  %336 = vmatprep.subr.mxu0 0.0
  %337 = vmatpush1.msra.mxu0 %v158
  %338 = vmatprep.subr.mxu0 0.0
  %339 = vmatpush1.msra.mxu0 %v161
  %340 = vmatprep.subr.mxu0 0.0
  %341 = vmatpush1.msra.mxu0 %v164
  %342 = vmatprep.subr.mxu0 0.0
  %343 = vmatpush1.msra.mxu0 %v167
  %344 = vmatprep.subr.mxu0 0.0
  %345 = vmatpush1.msra.mxu0 %v170
  %346 = vmatprep.subr.mxu0 0.0
  %347 = vmatpush1.msra.mxu0 %v173
  %348 = vmatprep.subr.mxu0 0.0
  %349 = vmatpush1.msra.mxu0 %v176
  %350 = vmatprep.subr.mxu0 0.0
  %351 = vmatpush1.msra.mxu0 %v179
  %352 = vmatprep.subr.mxu0 0.0
  %353 = vmatpush1.msra.mxu0 %v182
  %354 = vmatprep.subr.mxu0 0.0
  %355 = vmatpush1.msra.mxu0 %v185
  %356 = vmatprep.subr.mxu0 0.0
  %357 = vmatpush1.msra.mxu0 %v188
  %358 = vmatprep.subr.mxu0 0.0
  %359 = vmatpush1.msra.mxu0 %v191
  %360 = vmatprep.subr.mxu0 0.0
  %361 = vmatpush1.msra.mxu0 %v194
  %362 = vmatprep.subr.mxu0 0.0
  %363 = vmatpush1.msra.mxu0 %v197
  %364 = vmatprep.subr.mxu0 0.0
  %365 = vmatpush1.msra.mxu0 %v200
  %366 = vmatprep.subr.mxu0 0.0
  %367 = vmatpush1.msra.mxu0 %v203
  %368 = vmatprep.subr.mxu0 0.0
  %369 = vmatpush1.msra.mxu0 %v206
  %370 = vmatprep.subr.mxu0 0.0
  %371 = vmatpush1.msra.mxu0 %v209
  %372 = vmatprep.subr.mxu0 0.0
  %373 = vmatpush1.msra.mxu0 %v212
  %374 = vmatprep.subr.mxu0 0.0
  %375 = vmatpush1.msra.mxu0 %v215
  %376 = vmatprep.subr.mxu0 0.0
  %377 = vmatpush1.msra.mxu0 %v218
  %378 = vmatprep.subr.mxu0 0.0
  %379 = vmatpush1.msra.mxu0 %v221
  %380 = vmatprep.subr.mxu0 0.0
  %381 = vmatpush1.msra.mxu0 %v224
  %382 = vmatprep.subr.mxu0 0.0
  %383 = vmatpush1.msra.mxu0 %v227
  %384 = vmatprep.subr.mxu0 0.0
  %385 = vmatpush1.msra.mxu0 %v230
  %386 = vmatprep.subr.mxu0 0.0
  %387 = vmatpush1.msra.mxu0 %v233
  %388 = vmatprep.subr.mxu0 0.0
  %389 = vmatpush1.msra.mxu0 %v236
  %390 = vmatprep.subr.mxu0 0.0
  %391 = vmatpush1.msra.mxu0 %v239
  %392 = vmatprep.mubr.f32.mxu0 %v143
  %393 = vmatmul.mubr.f32.gmra.mrb[0].mxu0 %v142
  %v394 = vpop.f32.mrb[0].mxu0
  %v395 = vadd.f32 %v253, %v394
  %v396 = vpop.f32.mrb[0].mxu0
  %397 = vdwg.mxu0
  %v398 = vmax.f32 %v324, 0.0
  %v399 = vmax.f32 %v326, 0.0
  %v400 = vmax.f32 %v395, 0.0
  %v401 = vld [vmem:[%s5] sm:$0xff]
  %v402 = vld [vmem:[%s5 + $0x8] sm:$0xff]
  %v403 = vld [vmem:[%s5 + $0x10] sm:$0xff]
  %v404 = vld [vmem:[%s5 + $0x18] sm:$0xff]
  %v405 = vld [vmem:[%s5 + $0x20] sm:$0xff]
  %v406 = vld [vmem:[%s5 + $0x28] sm:$0xff]
  %v407 = vld [vmem:[%s5 + $0x30] sm:$0xff]
  %v408 = vld [vmem:[%s5 + $0x38] sm:$0xff]
  %v409 = vld [vmem:[%s5 + $0x40] sm:$0xff]
  %v410 = vld [vmem:[%s5 + $0x48] sm:$0xff]
  %v411 = vld [vmem:[%s5 + $0x50] sm:$0xff]
  %v412 = vld [vmem:[%s5 + $0x58] sm:$0xff]
  %v413 = vld [vmem:[%s5 + $0x60] sm:$0xff]
  %v414 = vld [vmem:[%s5 + $0x68] sm:$0xff]
  %v415 = vld [vmem:[%s5 + $0x70] sm:$0xff]
  %v416 = vld [vmem:[%s5 + $0x78] sm:$0xff]
  %v417 = vld [vmem:[%s5 + $0x80] sm:$0xff]
  %v418 = vld [vmem:[%s5 + $0x88] sm:$0xff]
  %v419 = vld [vmem:[%s5 + $0x90] sm:$0xff]
  %v420 = vld [vmem:[%s5 + $0x98] sm:$0xff]
  %v421 = vld [vmem:[%s5 + $0xa0] sm:$0xff]
  %v422 = vld [vmem:[%s5 + $0xa8] sm:$0xff]
  %v423 = vld [vmem:[%s5 + $0xb0] sm:$0xff]
  %v424 = vld [vmem:[%s5 + $0xb8] sm:$0xff]
  %v425 = vld [vmem:[%s5 + $0xc0] sm:$0xff]
  %v426 = vld [vmem:[%s5 + $0xc8] sm:$0xff]
  %v427 = vld [vmem:[%s5 + $0xd0] sm:$0xff]
  %v428 = vld [vmem:[%s5 + $0xd8] sm:$0xff]
  %v429 = vld [vmem:[%s5 + $0xe0] sm:$0xff]
  %v430 = vld [vmem:[%s5 + $0xe8] sm:$0xff]
  %v431 = vld [vmem:[%s5 + $0xf0] sm:$0xff]
  %v432 = vld [vmem:[%s5 + $0xf8] sm:$0xff]
  %v433 = vld [vmem:[%s5 + $0x100] sm:$0xff]
  %v434 = vld [vmem:[%s5 + $0x108] sm:$0xff]
  %v435 = vld [vmem:[%s5 + $0x110] sm:$0xff]
  %v436 = vld [vmem:[%s5 + $0x118] sm:$0xff]
  %v437 = vld [vmem:[%s6] sm:$0x1]
  %v439 = vlaneseq
  %v440 = vshrl.u32 %v439, 7
  %v441 = vsub.s32 0, %v440
  %v442 = vrot.slane %v437, %v441
  %vm444 = vcmask 261120
  %v446 = vsel %vm444, %v400, 0
  %448 = vmatprep.subr.mxu0 0.0
  %449 = vmatpush1.msra.mxu0 %v401
  %450 = vmatprep.subr.mxu0 0.0
  %451 = vmatpush1.msra.mxu0 %v402
  %452 = vmatprep.subr.mxu0 0.0
  %453 = vmatpush1.msra.mxu0 %v403
  %454 = vmatprep.subr.mxu0 0.0
  %455 = vmatpush1.msra.mxu0 %v404
  %456 = vmatprep.subr.mxu0 0.0
  %457 = vmatpush1.msra.mxu0 %v405
  %458 = vmatprep.subr.mxu0 0.0
  %459 = vmatpush1.msra.mxu0 %v406
  %460 = vmatprep.subr.mxu0 0.0
  %461 = vmatpush1.msra.mxu0 %v407
  %462 = vmatprep.subr.mxu0 0.0
  %463 = vmatpush1.msra.mxu0 %v408
  %464 = vmatprep.subr.mxu0 0.0
  %465 = vmatpush1.msra.mxu0 %v409
  %466 = vmatprep.subr.mxu0 0.0
  %467 = vmatpush1.msra.mxu0 %v410
  %468 = vmatprep.subr.mxu0 0.0
  %469 = vmatpush1.msra.mxu0 %v411
  %470 = vmatprep.subr.mxu0 0.0
  %471 = vmatpush1.msra.mxu0 %v412
  %472 = vmatprep.subr.mxu0 0.0
  %473 = vmatpush1.msra.mxu0 %v413
  %474 = vmatprep.subr.mxu0 0.0
  %475 = vmatpush1.msra.mxu0 %v414
  %476 = vmatprep.subr.mxu0 0.0
  %477 = vmatpush1.msra.mxu0 %v415
  %478 = vmatprep.subr.mxu0 0.0
  %479 = vmatpush1.msra.mxu0 %v416
  %480 = vmatprep.subr.mxu0 0.0
  %481 = vmatpush1.msra.mxu0 %v417
  %482 = vmatprep.subr.mxu0 0.0
  %483 = vmatpush1.msra.mxu0 %v418
  %484 = vmatprep.subr.mxu0 0.0
  %485 = vmatpush1.msra.mxu0 %v419
  %486 = vmatprep.subr.mxu0 0.0
  %487 = vmatpush1.msra.mxu0 %v420
  %488 = vmatprep.subr.mxu0 0.0
  %489 = vmatpush1.msra.mxu0 %v421
  %490 = vmatprep.subr.mxu0 0.0
  %491 = vmatpush1.msra.mxu0 %v422
  %492 = vmatprep.subr.mxu0 0.0
  %493 = vmatpush1.msra.mxu0 %v423
  %494 = vmatprep.subr.mxu0 0.0
  %495 = vmatpush1.msra.mxu0 %v424
  %496 = vmatprep.subr.mxu0 0.0
  %497 = vmatpush1.msra.mxu0 %v425
  %498 = vmatprep.subr.mxu0 0.0
  %499 = vmatpush1.msra.mxu0 %v426
  %500 = vmatprep.subr.mxu0 0.0
  %501 = vmatpush1.msra.mxu0 %v427
  %502 = vmatprep.subr.mxu0 0.0
  %503 = vmatpush1.msra.mxu0 %v428
  %504 = vmatprep.subr.mxu0 0.0
  %505 = vmatpush1.msra.mxu0 %v429
  %506 = vmatprep.subr.mxu0 0.0
  %507 = vmatpush1.msra.mxu0 %v430
  %508 = vmatprep.subr.mxu0 0.0
  %509 = vmatpush1.msra.mxu0 %v431
  %510 = vmatprep.subr.mxu0 0.0
  %511 = vmatpush1.msra.mxu0 %v432
  %512 = vmatprep.mubr.f32.mxu0 %v399
  %513 = vmatmul.mubr.f32.gmra.mrb[0].mxu0 %v398
  %v514 = vpop.f32.mrb[0].mxu0
  %v515 = vadd.f32 %v442, %v514
  %v516 = vpop.f32.mrb[0].mxu0
  %517 = vdwg.mxu0
  %518 = vmatprep.subr.mxu0 0.0
  %519 = vmatpush1.msra.mxu0 %v433
  %520 = vmatprep.subr.mxu0 0.0
  %521 = vmatpush1.msra.mxu0 %v434
  %522 = vmatprep.subr.mxu0 0.0
  %523 = vmatpush1.msra.mxu0 %v435
  %524 = vmatprep.subr.mxu0 0.0
  %525 = vmatpush1.msra.mxu0 %v436
  %526 = vmatprep.subr.mxu0 0.0
  %527 = vmatpush1.msra.mxu0 0.0
  %528 = vmatprep.subr.mxu0 0.0
  %529 = vmatpush1.msra.mxu0 0.0
  %530 = vmatprep.subr.mxu0 0.0
  %531 = vmatpush1.msra.mxu0 0.0
  %532 = vmatprep.subr.mxu0 0.0
  %533 = vmatpush1.msra.mxu0 0.0
  %534 = vmatprep.subr.mxu0 0.0
  %535 = vmatpush1.msra.mxu0 0.0
  %536 = vmatprep.subr.mxu0 0.0
  %537 = vmatpush1.msra.mxu0 0.0
  %538 = vmatprep.subr.mxu0 0.0
  %539 = vmatpush1.msra.mxu0 0.0
  %540 = vmatprep.subr.mxu0 0.0
  %541 = vmatpush1.msra.mxu0 0.0
  %542 = vmatprep.subr.mxu0 0.0
  %543 = vmatpush1.msra.mxu0 0.0
  %544 = vmatprep.subr.mxu0 0.0
  %545 = vmatpush1.msra.mxu0 0.0
  %546 = vmatprep.subr.mxu0 0.0
  %547 = vmatpush1.msra.mxu0 0.0
  %548 = vmatprep.subr.mxu0 0.0
  %549 = vmatpush1.msra.mxu0 0.0
  %550 = vmatprep.subr.mxu0 0.0
  %551 = vmatpush1.msra.mxu0 0.0
  %552 = vmatprep.subr.mxu0 0.0
  %553 = vmatpush1.msra.mxu0 0.0
  %554 = vmatprep.subr.mxu0 0.0
  %555 = vmatpush1.msra.mxu0 0.0
  %556 = vmatprep.subr.mxu0 0.0
  %557 = vmatpush1.msra.mxu0 0.0
  %558 = vmatprep.subr.mxu0 0.0
  %559 = vmatpush1.msra.mxu0 0.0
  %560 = vmatprep.subr.mxu0 0.0
  %561 = vmatpush1.msra.mxu0 0.0
  %562 = vmatprep.subr.mxu0 0.0
  %563 = vmatpush1.msra.mxu0 0.0
  %564 = vmatprep.subr.mxu0 0.0
  %565 = vmatpush1.msra.mxu0 0.0
  %566 = vmatprep.subr.mxu0 0.0
  %567 = vmatpush1.msra.mxu0 0.0
  %568 = vmatprep.subr.mxu0 0.0
  %569 = vmatpush1.msra.mxu0 0.0
  %570 = vmatprep.subr.mxu0 0.0
  %571 = vmatpush1.msra.mxu0 0.0
  %572 = vmatprep.subr.mxu0 0.0
  %573 = vmatpush1.msra.mxu0 0.0
  %574 = vmatprep.subr.mxu0 0.0
  %575 = vmatpush1.msra.mxu0 0.0
  %576 = vmatprep.subr.mxu0 0.0
  %577 = vmatpush1.msra.mxu0 0.0
  %578 = vmatprep.subr.mxu0 0.0
  %579 = vmatpush1.msra.mxu0 0.0
  %580 = vmatprep.subr.mxu0 0.0
  %581 = vmatpush1.msra.mxu0 0.0
  %582 = vmatprep.mubr.f32.mxu0 0.0
  %583 = vmatmul.mubr.f32.gmra.mrb[0].mxu0 %v446
  %v584 = vpop.f32.mrb[0].mxu0
  %v585 = vadd.f32 %v515, %v584
  %v586 = vpop.f32.mrb[0].mxu0
  %587 = vdwg.mxu0
  %588 = vst [vmem:[%s7] sm:$0x3] %v585
  // Predicated region
  $region30: #{_mlp_forward_packed.1} parent=0 // pred_check
    _
  $region31: #{_mlp_forward_packed.1} parent=0 // pred_check_branch
    %590 = sbr.rel (0) target = $region33
  $region32: #{_mlp_forward_packed.1} parent=0 // pred_region
    _
  $region33: #{_mlp_forward_packed.1} parent=0 // pred_fallthru
    _
  // Predicated region
  $region34: #{_mlp_forward_packed.1} parent=0 // pred_check
    _
  $region35: #{_mlp_forward_packed.1} parent=0 // pred_check_branch
    %592 = sbr.rel (0) target = $region37
  $region36: #{_mlp_forward_packed.1} parent=0 // pred_region
    _
  $region37: #{_mlp_forward_packed.1} parent=0 // pred_fallthru
    _

</llo_original>
